<compile_context>
chip_gen: v7x
topology: tpu7x:2x2x1
jax: 0.10.0
libtpu: 0.0.40
codegen_flags: <defaults>
</compile_context>

<pallas_src>
import functools

import jax
import jax.numpy as jnp
from jax.experimental import pallas as pl
from jax.experimental.pallas import tpu as pltpu


def _brc_caspp_kernel(x_ref, sc_ref, sh_ref, w_ref, b_ref, o_ref, pad_ref,
                      *, dilation, H, WCin, WCout):
    """Fused BN(eval)+ReLU+dilated-3x3-conv for one batch element.

    x_ref:   (1, H, W*Cin)        input slab, channels folded into lanes
    sc_ref:  (1, W*Cin)           BN scale tiled across W
    sh_ref:  (1, W*Cin)           BN shift tiled across W
    w_ref:   (3, W*Cin, W*Cout)   banded block-Toeplitz conv weight, one per kh
    b_ref:   (1, W*Cout)          conv bias tiled across W
    o_ref:   (1, H, W*Cout)       output slab (lane-dense)
    pad_ref: (H+2d, W*Cin)        VMEM scratch, vertical halo only
    """
    d = dilation

    # BN (eval) + ReLU written into the row-padded scratch.  Only the 2*d halo
    # rows are zero-filled; the interior is fully overwritten.
    pad_ref[0:d, :] = jnp.zeros((d, WCin), jnp.float32)
    pad_ref[H + d:H + 2 * d, :] = jnp.zeros((d, WCin), jnp.float32)
    x = x_ref[0].astype(jnp.float32)                          # (H, W*Cin)
    pad_ref[d:H + d, :] = jnp.maximum(x * sc_ref[...] + sh_ref[...], 0.0)

    # Dilated 3x3 conv: one (H, W*Cin) x (W*Cin, W*Cout) matmul per vertical
    # tap kh.  Horizontal taps + horizontal zero padding live inside w_ref, so
    # each tap is just a sublane-shifted read of the scratch -- no lane
    # slicing, no reshapes, lane-dense (H, W*Cout) accumulator.
    acc = jnp.dot(pad_ref[0:H, :], w_ref[0],
                  preferred_element_type=jnp.float32)
    acc = acc + jnp.dot(pad_ref[d:d + H, :], w_ref[1],
                        preferred_element_type=jnp.float32)
    acc = acc + jnp.dot(pad_ref[2 * d:2 * d + H, :], w_ref[2],
                        preferred_element_type=jnp.float32)

    o_ref[0] = (acc + b_ref[...]).astype(o_ref.dtype)


def brc_caspp_pallas(x_nhwc, bn_scale, bn_shift, w_hwio, conv_bias, dilation):
    """x_nhwc: (N,H,W,Cin); bn_scale/bn_shift: (Cin,); w_hwio: (3,3,Cin,Cout);
    conv_bias: (Cout,). Returns (N,H,W,Cout)."""
    N, H, W, Cin = x_nhwc.shape
    Cout = w_hwio.shape[-1]
    d = dilation
    WCin, WCout = W * Cin, W * Cout

    # ---- layout prep outside the kernel (free reshapes + one tiny einsum) ----
    # Fold (W, Cin) into the lane dim: lane l = w*Cin + ci.
    x2 = x_nhwc.reshape(N, H, WCin)
    # BN scale/shift per lane (tiled across W).
    sc_row = jnp.tile(bn_scale.reshape(-1), W).reshape(1, WCin)
    sh_row = jnp.tile(bn_shift.reshape(-1), W).reshape(1, WCin)
    # Conv bias per output lane (lane l = w*Cout + co).
    b_row = jnp.tile(conv_bias.reshape(-1), W).reshape(1, WCout)
    # Banded block-Toeplitz weight, one (W*Cin, W*Cout) matrix per kh tap:
    #   B[kh, w_in*Cin+ci, w_out*Cout+co] = w_hwio[kh, kw, ci, co]
    #     where w_in = w_out + (kw-1)*d, and zero if w_in is out of range
    #     (this realizes the conv's horizontal zero padding).
    kw_idx = jnp.arange(3)
    w_in = jnp.arange(W)
    w_out = jnp.arange(W)
    sel = (w_in[None, :, None]
           == w_out[None, None, :] + (kw_idx[:, None, None] - 1) * d)
    sel = sel.astype(w_hwio.dtype)                     # (3, W, W): [kw, w_in, w_out]
    w_banded = jnp.einsum('kxy,hkio->hxiyo', sel, w_hwio).reshape(3, WCin, WCout)

    kernel = functools.partial(_brc_caspp_kernel, dilation=d, H=H,
                               WCin=WCin, WCout=WCout)

    out = pl.pallas_call(
        kernel,
        out_shape=jax.ShapeDtypeStruct((N, H, WCout), jnp.float32),
        grid_spec=pltpu.PrefetchScalarGridSpec(
            num_scalar_prefetch=0,
            grid=(N,),
            in_specs=[
                pl.BlockSpec((1, H, WCin), lambda n: (n, 0, 0)),
                pl.BlockSpec((1, WCin), lambda n: (0, 0)),
                pl.BlockSpec((1, WCin), lambda n: (0, 0)),
                pl.BlockSpec((3, WCin, WCout), lambda n: (0, 0, 0)),
                pl.BlockSpec((1, WCout), lambda n: (0, 0)),
            ],
            out_specs=pl.BlockSpec((1, H, WCout), lambda n: (n, 0, 0)),
            scratch_shapes=[pltpu.VMEM((H + 2 * d, WCin), jnp.float32)],
        ),
        compiler_params=pltpu.CompilerParams(
            dimension_semantics=("parallel",)),
    )(x2, sc_row, sh_row, w_banded, b_row)

    return out.reshape(N, H, W, Cout)


def brc_caspp_reference(x_nhwc, bn_scale, bn_shift, w_hwio, conv_bias, dilation):
    """Plain-JAX reference for validation."""
    y = jnp.maximum(x_nhwc * bn_scale.reshape(1, 1, 1, -1)
                    + bn_shift.reshape(1, 1, 1, -1), 0.0)
    out = jax.lax.conv_general_dilated(
        y, w_hwio, window_strides=(1, 1),
        padding=[(dilation, dilation), (dilation, dilation)],
        rhs_dilation=(dilation, dilation),
        dimension_numbers=("NHWC", "HWIO", "NHWC"))
    return out + conv_bias.reshape(1, 1, 1, -1)


if __name__ == "__main__":
    # Shapes implied by the module: BRC_caspp(in_channels=4, out_channels=8, dilation=2)
    N, Cin, H, W = 2, 4, 16, 16
    Cout = 8
    dilation = 2
    eps = 1e-5

    key = jax.random.PRNGKey(0)
    k_x, k_g, k_b, k_m, k_v, k_w, k_cb = jax.random.split(key, 7)

    # Input in PyTorch's NCHW convention, transposed to NHWC for the kernel.
    x_nchw = jax.random.normal(k_x, (N, Cin, H, W), dtype=jnp.float32)
    x_nhwc = jnp.transpose(x_nchw, (0, 2, 3, 1))

    # Deterministic synthetic BatchNorm parameters / running stats.
    gamma = 1.0 + 0.1 * jax.random.normal(k_g, (Cin,), dtype=jnp.float32)
    beta = 0.1 * jax.random.normal(k_b, (Cin,), dtype=jnp.float32)
    running_mean = 0.1 * jax.random.normal(k_m, (Cin,), dtype=jnp.float32)
    running_var = jax.random.uniform(k_v, (Cin,), dtype=jnp.float32,
                                     minval=0.5, maxval=1.5)
    bn_scale = gamma / jnp.sqrt(running_var + eps)
    bn_shift = beta - running_mean * bn_scale

    # Conv weight: PyTorch layout (Cout, Cin, 3, 3) -> HWIO (3, 3, Cin, Cout).
    w_oihw = 0.1 * jax.random.normal(k_w, (Cout, Cin, 3, 3), dtype=jnp.float32)
    w_hwio = jnp.transpose(w_oihw, (2, 3, 1, 0))
    conv_bias = 0.1 * jax.random.normal(k_cb, (Cout,), dtype=jnp.float32)

    out = brc_caspp_pallas(x_nhwc, bn_scale, bn_shift, w_hwio, conv_bias,
                           dilation)
    out = jax.block_until_ready(out)

    ref = brc_caspp_reference(x_nhwc, bn_scale, bn_shift, w_hwio, conv_bias,
                              dilation)
    ref = jax.block_until_ready(ref)

    assert out.shape == (N, H, W, Cout), out.shape
    assert jnp.allclose(out, ref, atol=1e-4, rtol=1e-4), (
        float(jnp.max(jnp.abs(out - ref))))

    print("KERNEL_OK")
</pallas_src>

<mosaic_0001>
module attributes {stable_mosaic.version = 11 : i64} {
  func.func @_brc_caspp_kernel(%arg0: i32, %arg1: memref<1x16x64xf32, #tpu.memory_space<vmem>>, %arg2: memref<1x64xf32, #tpu.memory_space<vmem>>, %arg3: memref<1x64xf32, #tpu.memory_space<vmem>>, %arg4: memref<3x64x128xf32, #tpu.memory_space<vmem>>, %arg5: memref<1x128xf32, #tpu.memory_space<vmem>>, %arg6: memref<1x16x128xf32, #tpu.memory_space<vmem>>, %arg7: memref<20x64xf32, #tpu.memory_space<vmem>>) attributes {dimension_semantics = [#tpu.dimension_semantics<parallel>], iteration_bounds = array<i64: 2>, scalar_prefetch = 0 : i64, scratch_operands = 1 : i64, tpu.core_type = #tpu.core_type<tc>, window_params = [{transform_indices = @transform_0, window_bounds = array<i64: 1, 16, 64>}, {pipeline_mode = #tpu.pipeline_mode<synchronous>, transform_indices = @transform_1, window_bounds = array<i64: 1, 64>}, {pipeline_mode = #tpu.pipeline_mode<synchronous>, transform_indices = @transform_2, window_bounds = array<i64: 1, 64>}, {pipeline_mode = #tpu.pipeline_mode<synchronous>, transform_indices = @transform_3, window_bounds = array<i64: 3, 64, 128>}, {pipeline_mode = #tpu.pipeline_mode<synchronous>, transform_indices = @transform_4, window_bounds = array<i64: 1, 128>}, {transform_indices = @transform_5, window_bounds = array<i64: 1, 16, 128>}]} {
    %cst = arith.constant 0.000000e+00 : f32
    %0 = vector.broadcast %cst : f32 to vector<2x64xf32>
    %c0 = arith.constant 0 : index
    %c0_0 = arith.constant 0 : index
    %1 = vector.load %arg7[%c0, %c0_0] : memref<20x64xf32, #tpu.memory_space<vmem>>, vector<2x64xf32>
    tpu.vector_store %arg7[%c0, %c0_0], %0 {strides = array<i32>} : memref<20x64xf32, #tpu.memory_space<vmem>>, vector<2x64xf32>,
    %cst_1 = arith.constant 0.000000e+00 : f32
    %2 = vector.broadcast %cst_1 : f32 to vector<2x64xf32>
    %c18 = arith.constant 18 : index
    %c0_2 = arith.constant 0 : index
    %3 = vector.load %arg7[%c18, %c0_2] : memref<20x64xf32, #tpu.memory_space<vmem>>, vector<2x64xf32>
    tpu.vector_store %arg7[%c18, %c0_2], %2 {strides = array<i32>} : memref<20x64xf32, #tpu.memory_space<vmem>>, vector<2x64xf32>,
    %c0_3 = arith.constant 0 : index
    %c0_4 = arith.constant 0 : index
    %c0_5 = arith.constant 0 : index
    %4 = vector.load %arg1[%c0_3, %c0_4, %c0_5] : memref<1x16x64xf32, #tpu.memory_space<vmem>>, vector<1x16x64xf32>
    %5 = vector.shape_cast %4 : vector<1x16x64xf32> to vector<16x64xf32>
    %c0_6 = arith.constant 0 : index
    %c0_7 = arith.constant 0 : index
    %6 = vector.load %arg2[%c0_6, %c0_7] : memref<1x64xf32, #tpu.memory_space<vmem>>, vector<1x64xf32>
    %7 = vector.broadcast %6 : vector<1x64xf32> to vector<16x64xf32>
    %8 = arith.mulf %5, %7 : vector<16x64xf32>
    %c0_8 = arith.constant 0 : index
    %c0_9 = arith.constant 0 : index
    %9 = vector.load %arg3[%c0_8, %c0_9] : memref<1x64xf32, #tpu.memory_space<vmem>>, vector<1x64xf32>
    %10 = vector.broadcast %9 : vector<1x64xf32> to vector<16x64xf32>
    %11 = arith.addf %8, %10 : vector<16x64xf32>
    %cst_10 = arith.constant 0.000000e+00 : f32
    %12 = vector.broadcast %cst_10 : f32 to vector<16x64xf32>
    %13 = arith.maximumf %11, %12 : vector<16x64xf32>
    %c2 = arith.constant 2 : index
    %c0_11 = arith.constant 0 : index
    %14 = vector.load %arg7[%c2, %c0_11] : memref<20x64xf32, #tpu.memory_space<vmem>>, vector<16x64xf32>
    tpu.vector_store %arg7[%c2, %c0_11], %13 {strides = array<i32>} : memref<20x64xf32, #tpu.memory_space<vmem>>, vector<16x64xf32>,
    %c0_12 = arith.constant 0 : index
    %c0_13 = arith.constant 0 : index
    %15 = vector.load %arg7[%c0_12, %c0_13] : memref<20x64xf32, #tpu.memory_space<vmem>>, vector<16x64xf32>
    %c0_14 = arith.constant 0 : index
    %c0_15 = arith.constant 0 : index
    %c0_16 = arith.constant 0 : index
    %16 = vector.load %arg4[%c0_14, %c0_15, %c0_16] : memref<3x64x128xf32, #tpu.memory_space<vmem>>, vector<1x64x128xf32>
    %17 = vector.shape_cast %16 : vector<1x64x128xf32> to vector<64x128xf32>
    %cst_17 = arith.constant dense<0.000000e+00> : vector<16x128xf32>
    %18 = tpu.matmul %15, %17, %cst_17 {dimension_numbers = #tpu.dot_dimension_numbers<[1], [0], [0], [1], [0, 0, 1, 1], [], []>} : vector<16x64xf32>, vector<64x128xf32>, vector<16x128xf32> -> vector<16x128xf32>
    %c2_18 = arith.constant 2 : index
    %c0_19 = arith.constant 0 : index
    %19 = vector.load %arg7[%c2_18, %c0_19] : memref<20x64xf32, #tpu.memory_space<vmem>>, vector<16x64xf32>
    %c1 = arith.constant 1 : index
    %c0_20 = arith.constant 0 : index
    %c0_21 = arith.constant 0 : index
    %20 = vector.load %arg4[%c1, %c0_20, %c0_21] : memref<3x64x128xf32, #tpu.memory_space<vmem>>, vector<1x64x128xf32>
    %21 = vector.shape_cast %20 : vector<1x64x128xf32> to vector<64x128xf32>
    %cst_22 = arith.constant dense<0.000000e+00> : vector<16x128xf32>
    %22 = tpu.matmul %19, %21, %cst_22 {dimension_numbers = #tpu.dot_dimension_numbers<[1], [0], [0], [1], [0, 0, 1, 1], [], []>} : vector<16x64xf32>, vector<64x128xf32>, vector<16x128xf32> -> vector<16x128xf32>
    %23 = arith.addf %18, %22 : vector<16x128xf32>
    %c4 = arith.constant 4 : index
    %c0_23 = arith.constant 0 : index
    %24 = vector.load %arg7[%c4, %c0_23] : memref<20x64xf32, #tpu.memory_space<vmem>>, vector<16x64xf32>
    %c2_24 = arith.constant 2 : index
    %c0_25 = arith.constant 0 : index
    %c0_26 = arith.constant 0 : index
    %25 = vector.load %arg4[%c2_24, %c0_25, %c0_26] : memref<3x64x128xf32, #tpu.memory_space<vmem>>, vector<1x64x128xf32>
    %26 = vector.shape_cast %25 : vector<1x64x128xf32> to vector<64x128xf32>
    %cst_27 = arith.constant dense<0.000000e+00> : vector<16x128xf32>
    %27 = tpu.matmul %24, %26, %cst_27 {dimension_numbers = #tpu.dot_dimension_numbers<[1], [0], [0], [1], [0, 0, 1, 1], [], []>} : vector<16x64xf32>, vector<64x128xf32>, vector<16x128xf32> -> vector<16x128xf32>
    %28 = arith.addf %23, %27 : vector<16x128xf32>
    %c0_28 = arith.constant 0 : index
    %c0_29 = arith.constant 0 : index
    %29 = vector.load %arg5[%c0_28, %c0_29] : memref<1x128xf32, #tpu.memory_space<vmem>>, vector<1x128xf32>
    %30 = vector.broadcast %29 : vector<1x128xf32> to vector<16x128xf32>
    %31 = arith.addf %28, %30 : vector<16x128xf32>
    %c0_30 = arith.constant 0 : index
    %c0_31 = arith.constant 0 : index
    %c0_32 = arith.constant 0 : index
    %32 = vector.load %arg6[%c0_30, %c0_31, %c0_32] : memref<1x16x128xf32, #tpu.memory_space<vmem>>, vector<1x16x128xf32>
    %33 = vector.shape_cast %32 : vector<1x16x128xf32> to vector<16x128xf32>
    %34 = vector.shape_cast %31 : vector<16x128xf32> to vector<1x16x128xf32>
    tpu.vector_store %arg6[%c0_30, %c0_31, %c0_32], %34 {strides = array<i32>} : memref<1x16x128xf32, #tpu.memory_space<vmem>>, vector<1x16x128xf32>,
    return
  }
  func.func @transform_0(%arg0: i32) -> (i32, i32, i32) {
    %c0_i32 = arith.constant 0 : i32
    %c0_i32_0 = arith.constant 0 : i32
    %c0_i32_1 = arith.constant 0 : i32
    return %arg0, %c0_i32, %c0_i32_0 : i32, i32, i32
  }
  func.func @transform_1(%arg0: i32) -> (i32, i32) {
    %c0_i32 = arith.constant 0 : i32
    %c0_i32_0 = arith.constant 0 : i32
    %c0_i32_1 = arith.constant 0 : i32
    return %c0_i32, %c0_i32_0 : i32, i32
  }
  func.func @transform_2(%arg0: i32) -> (i32, i32) {
    %c0_i32 = arith.constant 0 : i32
    %c0_i32_0 = arith.constant 0 : i32
    %c0_i32_1 = arith.constant 0 : i32
    return %c0_i32, %c0_i32_0 : i32, i32
  }
  func.func @transform_3(%arg0: i32) -> (i32, i32, i32) {
    %c0_i32 = arith.constant 0 : i32
    %c0_i32_0 = arith.constant 0 : i32
    %c0_i32_1 = arith.constant 0 : i32
    %c0_i32_2 = arith.constant 0 : i32
    return %c0_i32, %c0_i32_0, %c0_i32_1 : i32, i32, i32
  }
  func.func @transform_4(%arg0: i32) -> (i32, i32) {
    %c0_i32 = arith.constant 0 : i32
    %c0_i32_0 = arith.constant 0 : i32
    %c0_i32_1 = arith.constant 0 : i32
    return %c0_i32, %c0_i32_0 : i32, i32
  }
  func.func @transform_5(%arg0: i32) -> (i32, i32, i32) {
    %c0_i32 = arith.constant 0 : i32
    %c0_i32_0 = arith.constant 0 : i32
    %c0_i32_1 = arith.constant 0 : i32
    return %arg0, %c0_i32, %c0_i32_0 : i32, i32, i32
  }
}

</mosaic_0001>

<llo_original>
// kernel: tpu_custom_call.1
$region0: #{tpu_custom_call.1}
  #allocation0 [shape = 'u32[]', space=smem, size = 0x4, offset = 0x4, fixed_abs, tag = 'smem constant byte address 0x4 - core index']
  #allocation1 [shape = 'u32[144,128]{1,0:T(1,128)}', space=vmem, size = 0x12000, scoped, tag = 'internal scratch']
  #allocation2 [shape = 'f32[20,64]{1,0:T(8,128)}', space=vmem, size = 0x3000, scoped, tag = 'scratch operand']
  %s0 = inlined_call_operand.hbm [shape: f32[2,16,64], index: 0, kind: input, shape index: {}]
  %s1 = inlined_call_operand.vmem [shape: f32[1,64], index: 1, kind: input, shape index: {}]
  %s2 = inlined_call_operand.vmem [shape: f32[1,64], index: 2, kind: input, shape index: {}]
  %s3 = inlined_call_operand.hbm [shape: f32[3,64,128], index: 3, kind: input, shape index: {}]
  %s4 = inlined_call_operand.vmem [shape: f32[1,128], index: 4, kind: input, shape index: {}]
  %s5 = inlined_call_operand.hbm [shape: f32[2,16,128], index: 5, kind: output, shape index: {}]
  %s6 = sld [smem:[#allocation0]]
  $region61: #{tpu_custom_call.1} parent=0
    _
  %s8 = ssub.s32 1, %s6
  %s9 = scalar_select 0, %s8, %s6
  $region1: #{tpu_custom_call.1} parent=0
    #allocation3 [shape = 'u8[16384]{0}', space=vmem, size = 0x4000, scoped, tag = 'input window, operand 0']
    #allocation4 [shape = 's32[2]{0}', space=sflag, size = 0x8, scoped, tag = 'scoped memory for tpu_custom_call.1']
    #allocation5 [shape = 's32[2]{0}', space=sflag, size = 0x8, scoped, tag = 'scoped memory for tpu_custom_call.1']
    #allocation6 [shape = 'u8[98304]{0}', space=vmem, size = 0x18000, scoped, tag = 'input window, operand 3, single buffered']
    #allocation7 [shape = 's32[1]{0}', space=sflag, size = 0x4, scoped, tag = 'scoped memory for tpu_custom_call.1']
    #allocation8 [shape = 'u8[16384]{0}', space=vmem, size = 0x4000, scoped, tag = 'output window, operand 0']
    %10 = vsyncpa [#allocation4], 0
    %s11 = scalar_lea.sflag [#allocation4], 1
    %12 = vsyncpa %s11, 0
    %13 = vsyncpa [#allocation7], 0
    %14 = vsyncpa [#allocation5], 0
    %s15 = scalar_lea.sflag [#allocation5], 1
    %16 = vsyncpa %s15, 0
    loop: start=0, step=1, limit=4
    $region2: #{tpu_custom_call.1} parent=1 // loop_pre_header
      _
    $region3: #{tpu_custom_call.1} parent=1 // loop_header
      %s18 = sphi 0, %s22
      %p19 = scmp.ge.s32.totalorder %s18, 4
      %s28 = sphi 0, %s30
      %s31 = sphi 0, %s28
      %s32 = sphi 0, %s31
      %s48 = sphi 0, %s32
      %s52 = sphi 0, %s52
      %s54 = sphi 0, %s52
      %s55 = sphi 0, %s54
      %s69 = sphi 0, %s55
      %s73 = sphi 0, %s73
      %s75 = sphi 0, %s73
      %s76 = sphi 0, %s75
      %s90 = sphi 0, %s76
      %s94 = sphi 0, %s94
      %s96 = sphi 0, %s94
      %s97 = sphi 0, %s96
      %s111 = sphi 0, %s97
      %s115 = sphi 0, %s115
      %s117 = sphi 0, %s115
      %s118 = sphi 0, %s117
      %s132 = sphi 0, %s118
      %s138 = sphi 0, %s140
      %s141 = sphi 0, %s138
      %s142 = sphi 0, %s141
      %s158 = sphi 0, %s142
    $region4: #{tpu_custom_call.1} parent=1 // loop_header_branch
      %21 = sbr.rel (%p19) target = $region8
    $region5: #{tpu_custom_call.1} parent=1 // loop_body
      %s23 = ssub.s32 %s18, 1
      %s24 = ssub.s32 %s18, 2
      %s25 = sadd.s32 %s18, 1
      %s26 = ssub.s32 %s18, %s25
      %p27 = scmp.eq.s32.totalorder %s26, 0
      %s29 = sadd.s32 %s28, 1
      %s30 = scalar_select %p27, %s28, %s29
      %p33 = pneg %p27
      %p34 = scmp.eq.s32.totalorder %s18, 1
      %p35 = por %p33, %p34
      %p36 = scmp.ne.s32.totalorder %s28, %s31
      %p37 = scmp.eq.s32.totalorder %s18, 0
      %p38 = por %p36, %p37
      %p39 = scmp.ne.s32.totalorder %s28, %s31
      %p40 = scmp.eq.s32.totalorder %s23, 1
      %p41 = por %p39, %p40
      %p42 = scmp.ne.s32.totalorder %s31, %s32
      %p43 = scmp.eq.s32.totalorder %s23, 0
      %p44 = por %p42, %p43
      %p45 = scmp.ne.s32.totalorder %s31, %s32
      %p46 = scmp.eq.s32.totalorder %s24, 1
      %p47 = por %p45, %p46
      %p49 = scmp.ne.s32.totalorder %s32, %s48
      %p50 = scmp.eq.s32.totalorder %s24, 0
      %p51 = por %p49, %p50
      %s53 = sadd.s32 %s52, 1
      %p56 = scmp.eq.s32.totalorder %s18, 1
      %p57 = scmp.ne.s32.totalorder %s52, %s54
      %p58 = scmp.eq.s32.totalorder %s18, 0
      %p59 = por %p57, %p58
      %p60 = scmp.ne.s32.totalorder %s52, %s54
      %p61 = scmp.eq.s32.totalorder %s23, 1
      %p62 = por %p60, %p61
      %p63 = scmp.ne.s32.totalorder %s54, %s55
      %p64 = scmp.eq.s32.totalorder %s23, 0
      %p65 = por %p63, %p64
      %p66 = scmp.ne.s32.totalorder %s54, %s55
      %p67 = scmp.eq.s32.totalorder %s24, 1
      %p68 = por %p66, %p67
      %p70 = scmp.ne.s32.totalorder %s55, %s69
      %p71 = scmp.eq.s32.totalorder %s24, 0
      %p72 = por %p70, %p71
      %s74 = sadd.s32 %s73, 1
      %p77 = scmp.eq.s32.totalorder %s18, 1
      %p78 = scmp.ne.s32.totalorder %s73, %s75
      %p79 = scmp.eq.s32.totalorder %s18, 0
      %p80 = por %p78, %p79
      %p81 = scmp.ne.s32.totalorder %s73, %s75
      %p82 = scmp.eq.s32.totalorder %s23, 1
      %p83 = por %p81, %p82
      %p84 = scmp.ne.s32.totalorder %s75, %s76
      %p85 = scmp.eq.s32.totalorder %s23, 0
      %p86 = por %p84, %p85
      %p87 = scmp.ne.s32.totalorder %s75, %s76
      %p88 = scmp.eq.s32.totalorder %s24, 1
      %p89 = por %p87, %p88
      %p91 = scmp.ne.s32.totalorder %s76, %s90
      %p92 = scmp.eq.s32.totalorder %s24, 0
      %p93 = por %p91, %p92
      %s95 = sadd.s32 %s94, 1
      %p98 = scmp.eq.s32.totalorder %s18, 1
      %p99 = scmp.ne.s32.totalorder %s94, %s96
      %p100 = scmp.eq.s32.totalorder %s18, 0
      %p101 = por %p99, %p100
      %p102 = scmp.ne.s32.totalorder %s94, %s96
      %p103 = scmp.eq.s32.totalorder %s23, 1
      %p104 = por %p102, %p103
      %p105 = scmp.ne.s32.totalorder %s96, %s97
      %p106 = scmp.eq.s32.totalorder %s23, 0
      %p107 = por %p105, %p106
      %p108 = scmp.ne.s32.totalorder %s96, %s97
      %p109 = scmp.eq.s32.totalorder %s24, 1
      %p110 = por %p108, %p109
      %p112 = scmp.ne.s32.totalorder %s97, %s111
      %p113 = scmp.eq.s32.totalorder %s24, 0
      %p114 = por %p112, %p113
      %s116 = sadd.s32 %s115, 1
      %p119 = scmp.eq.s32.totalorder %s18, 1
      %p120 = scmp.ne.s32.totalorder %s115, %s117
      %p121 = scmp.eq.s32.totalorder %s18, 0
      %p122 = por %p120, %p121
      %p123 = scmp.ne.s32.totalorder %s115, %s117
      %p124 = scmp.eq.s32.totalorder %s23, 1
      %p125 = por %p123, %p124
      %p126 = scmp.ne.s32.totalorder %s117, %s118
      %p127 = scmp.eq.s32.totalorder %s23, 0
      %p128 = por %p126, %p127
      %p129 = scmp.ne.s32.totalorder %s117, %s118
      %p130 = scmp.eq.s32.totalorder %s24, 1
      %p131 = por %p129, %p130
      %p133 = scmp.ne.s32.totalorder %s118, %s132
      %p134 = scmp.eq.s32.totalorder %s24, 0
      %p135 = por %p133, %p134
      %s136 = ssub.s32 %s18, %s25
      %p137 = scmp.eq.s32.totalorder %s136, 0
      %s139 = sadd.s32 %s138, 1
      %s140 = scalar_select %p137, %s138, %s139
      %p143 = pneg %p137
      %p144 = scmp.eq.s32.totalorder %s18, 1
      %p145 = por %p143, %p144
      %p146 = scmp.ne.s32.totalorder %s138, %s141
      %p147 = scmp.eq.s32.totalorder %s18, 0
      %p148 = por %p146, %p147
      %p149 = scmp.ne.s32.totalorder %s138, %s141
      %p150 = scmp.eq.s32.totalorder %s23, 1
      %p151 = por %p149, %p150
      %p152 = scmp.ne.s32.totalorder %s141, %s142
      %p153 = scmp.eq.s32.totalorder %s23, 0
      %p154 = por %p152, %p153
      %p155 = scmp.ne.s32.totalorder %s141, %s142
      %p156 = scmp.eq.s32.totalorder %s24, 1
      %p157 = por %p155, %p156
      %p159 = scmp.ne.s32.totalorder %s142, %s158
      %p160 = scmp.eq.s32.totalorder %s24, 0
      %p161 = por %p159, %p160
      %p162 = scmp.le.s32.totalorder 1, %s18
      %p163 = scmp.lt.s32.totalorder %s18, 3
      %p164 = pnand %p162, %p163
      %p165 = pneg %p164
      // Predicated region
      $region9: #{tpu_custom_call.1} parent=5 // pred_check
        _
      $region10: #{tpu_custom_call.1} parent=5 // pred_check_branch
        %167 = sbr.rel (%p164) target = $region12
      $region11: #{tpu_custom_call.1} parent=5 // pred_region
        %s168 = ssub.s32 %s18, 1
        // Predicated region
        $region13: #{tpu_custom_call.1} parent=11 // pred_check
          %p169 = pneg %p65
        $region14: #{tpu_custom_call.1} parent=11 // pred_check_branch
          %171 = sbr.rel (%p169) target = $region16
        $region15: #{tpu_custom_call.1} parent=11 // pred_region
          _
        $region16: #{tpu_custom_call.1} parent=11 // pred_fallthru
          _
        // Predicated region
        $region17: #{tpu_custom_call.1} parent=11 // pred_check
          %p172 = pneg %p86
        $region18: #{tpu_custom_call.1} parent=11 // pred_check_branch
          %174 = sbr.rel (%p172) target = $region20
        $region19: #{tpu_custom_call.1} parent=11 // pred_region
          _
        $region20: #{tpu_custom_call.1} parent=11 // pred_fallthru
          _
        // Predicated region
        $region21: #{tpu_custom_call.1} parent=11 // pred_check
          %p175 = pneg %p107
        $region22: #{tpu_custom_call.1} parent=11 // pred_check_branch
          %177 = sbr.rel (%p175) target = $region24
        $region23: #{tpu_custom_call.1} parent=11 // pred_region
          %s179 = ssub.s32 3072, 3072
          %180 = vsyncadd [#allocation7], %s179
          %s181 = sshll.u32 [#allocation6], 4
          %s182 = int_to_ptr.vmem [resolvable:$true] %s181
          %187 = dma.hbm_to_vmem [thread:$0]  %s3, 3072, %s182, [#allocation7], 128, 128, 8
        $region24: #{tpu_custom_call.1} parent=11 // pred_fallthru
          _
        // Predicated region
        $region25: #{tpu_custom_call.1} parent=11 // pred_check
          %p188 = pneg %p128
        $region26: #{tpu_custom_call.1} parent=11 // pred_check_branch
          %190 = sbr.rel (%p188) target = $region28
        $region27: #{tpu_custom_call.1} parent=11 // pred_region
          _
        $region28: #{tpu_custom_call.1} parent=11 // pred_fallthru
          _
      $region12: #{tpu_custom_call.1} parent=5 // pred_fallthru
        _
      %p191 = scmp.lt.s32.totalorder %s18, 2
      // Predicated region
      $region29: #{tpu_custom_call.1} parent=5 // pred_check
        %p192 = pneg %p191
      $region30: #{tpu_custom_call.1} parent=5 // pred_check_branch
        %194 = sbr.rel (%p192) target = $region32
      $region31: #{tpu_custom_call.1} parent=5 // pred_region
        // Predicated region
        $region33: #{tpu_custom_call.1} parent=31 // pred_check
          %p195 = pneg %p38
        $region34: #{tpu_custom_call.1} parent=31 // pred_check_branch
          %197 = sbr.rel (%p195) target = $region36
        $region35: #{tpu_custom_call.1} parent=31 // pred_region
          %s198 = sand.u32 %s28, 1
          %s199 = scalar_lea.sflag [#allocation4], %s198
          %s200 = sand.u32 %s28, 1
          %s201 = smul.addr %s200, 16
          %s202 = scalar_lea.vmem [#allocation3], %s201
          %s204 = ssub.s32 256, 256
          %205 = vsyncadd %s199, %s204
          %s206 = smul.addr %s18, 2
          %s207 = smul.addr %s206, 128
          %s208 = scalar_lea.hbm %s0, %s207
          %s209 = sshll.u32 %s202, 4
          %s210 = int_to_ptr.vmem [resolvable:$true] %s209
          %215 = dma.hbm_to_vmem [thread:$0]  %s208, 256, %s210, %s199, 128, 128, 8
        $region36: #{tpu_custom_call.1} parent=31 // pred_fallthru
          _
      $region32: #{tpu_custom_call.1} parent=5 // pred_fallthru
        _
      %p216 = scmp.le.s32.totalorder 1, %s18
      %p217 = scmp.lt.s32.totalorder %s18, 3
      %p218 = pnand %p216, %p217
      %p219 = pneg %p218
      // Predicated region
      $region37: #{tpu_custom_call.1} parent=5 // pred_check
        _
      $region38: #{tpu_custom_call.1} parent=5 // pred_check_branch
        %221 = sbr.rel (%p218) target = $region40
      $region39: #{tpu_custom_call.1} parent=5 // pred_region
        %s222 = ssub.s32 %s18, 1
        %s223 = sand.u32 %s31, 1
        %s224 = scalar_lea.sflag [#allocation4], %s223
        %s225 = sand.u32 %s31, 1
        %s226 = smul.addr %s225, 16
        %s227 = scalar_lea.vmem [#allocation3], %s226
        // Predicated region
        $region41: #{tpu_custom_call.1} parent=39 // pred_check
          %p228 = pneg %p44
        $region42: #{tpu_custom_call.1} parent=39 // pred_check_branch
          %230 = sbr.rel (%p228) target = $region44
        $region43: #{tpu_custom_call.1} parent=39 // pred_region
          %231 = dma.done %s224, 256
        $region44: #{tpu_custom_call.1} parent=39 // pred_fallthru
          _
        // Predicated region
        $region45: #{tpu_custom_call.1} parent=39 // pred_check
          %p232 = pneg %p107
        $region46: #{tpu_custom_call.1} parent=39 // pred_check_branch
          %234 = sbr.rel (%p232) target = $region48
        $region47: #{tpu_custom_call.1} parent=39 // pred_region
          %235 = dma.done [#allocation7], 3072
        $region48: #{tpu_custom_call.1} parent=39 // pred_fallthru
          _
        %s236 = sand.u32 %s31, 1
        %s237 = scalar_lea.sflag [#allocation4], %s236
        %s238 = sand.u32 %s31, 1
        %s239 = smul.addr %s238, 16
        %s240 = scalar_lea.vmem [#allocation3], %s239
        %p241 = pneg %p44
        %p242 = pneg %p41
        %p243 = pneg %p65
        %p244 = pneg %p62
        %p245 = pneg %p86
        %p246 = pneg %p83
        %p247 = pneg %p107
        %p248 = pneg %p104
        %p249 = pneg %p128
        %p250 = pneg %p125
        %p251 = pneg %p154
        %p252 = pneg %p151
        %s253 = sand.u32 %s141, 1
        %s254 = scalar_lea.sflag [#allocation5], %s253
        %s255 = sand.u32 %s141, 1
        %s256 = smul.addr %s255, 16
        %s257 = scalar_lea.vmem [#allocation8], %s256
        %vm258 = vcmask 517120
        %259 = vst.msk [vmem:[#allocation2] sm:$0x3] %vm258, 0.0
        %260 = vst.msk [vmem:[#allocation2 + $0x12] sm:$0x3] %vm258, 0.0
        %v261 = vld [vmem:[%s227] sm:$0xff]
        %v262 = vld [vmem:[%s227 + $0x8] sm:$0xff]
        %v263 = vld [vmem:[%s1] sm:$0x1]
        %v265 = vlaneseq
        %v266 = vshrl.u32 %v265, 7
        %v267 = vsub.s32 0, %v266
        %v268 = vrot.slane %v263, %v267
        %v270 = vmul.f32 %v261, %v268
        %v271 = vmul.f32 %v262, %v268
        %v272 = vld [vmem:[%s2] sm:$0x1]
        %v274 = vlaneseq
        %v275 = vshrl.u32 %v274, 7
        %v276 = vsub.s32 0, %v275
        %v277 = vrot.slane %v272, %v276
        %v279 = vadd.f32 %v270, %v277
        %v280 = vadd.f32 %v271, %v277
        %v281 = vmax.f32 %v279, 0.0
        %v282 = vmax.f32 %v280, 0.0
        %vm283 = vcmask 523264
        %284 = vst.msk [vmem:[#allocation2 + $0x2] sm:$0xff] %vm283, %v281
        %285 = vst.msk [vmem:[#allocation2 + $0xa] sm:$0xff] %vm283, %v282
        %v286 = vld [vmem:[#allocation2] sm:$0xff]
        %v287 = vld [vmem:[#allocation2 + $0x8] sm:$0xff]
        %v288 = vld [vmem:[#allocation6] sm:$0xff]
        %v289 = vld [vmem:[#allocation6 + $0x8] sm:$0xff]
        %v290 = vld [vmem:[#allocation6 + $0x10] sm:$0xff]
        %v291 = vld [vmem:[#allocation6 + $0x18] sm:$0xff]
        %v292 = vld [vmem:[#allocation6 + $0x20] sm:$0xff]
        %v293 = vld [vmem:[#allocation6 + $0x28] sm:$0xff]
        %v294 = vld [vmem:[#allocation6 + $0x30] sm:$0xff]
        %v295 = vld [vmem:[#allocation6 + $0x38] sm:$0xff]
        %v296 = vld [vmem:[#allocation2 + $0x2] sm:$0xff]
        %v297 = vld [vmem:[#allocation2 + $0xa] sm:$0xff]
        %s298 = scalar_lea.vmem [#allocation6], 64
        %v299 = vld [vmem:[%s298] sm:$0xff]
        %v300 = vld [vmem:[%s298 + $0x8] sm:$0xff]
        %v301 = vld [vmem:[%s298 + $0x10] sm:$0xff]
        %v302 = vld [vmem:[%s298 + $0x18] sm:$0xff]
        %v303 = vld [vmem:[%s298 + $0x20] sm:$0xff]
        %v304 = vld [vmem:[%s298 + $0x28] sm:$0xff]
        %v305 = vld [vmem:[%s298 + $0x30] sm:$0xff]
        %v306 = vld [vmem:[%s298 + $0x38] sm:$0xff]
        %v308 = vsel %vm283, %v296, 0
        %v311 = vsel %vm283, %v297, 0
        %313 = vmatprep.subr.mxu0 0.0
        %314 = vmatpush1.msra.mxu0 %v299
        %315 = vmatprep.subr.mxu0 0.0
        %316 = vmatpush1.msra.mxu0 %v300
        %317 = vmatprep.subr.mxu0 0.0
        %318 = vmatpush1.msra.mxu0 %v301
        %319 = vmatprep.subr.mxu0 0.0
        %320 = vmatpush1.msra.mxu0 %v302
        %321 = vmatprep.subr.mxu0 0.0
        %322 = vmatpush1.msra.mxu0 %v303
        %323 = vmatprep.subr.mxu0 0.0
        %324 = vmatpush1.msra.mxu0 %v304
        %325 = vmatprep.subr.mxu0 0.0
        %326 = vmatpush1.msra.mxu0 %v305
        %327 = vmatprep.subr.mxu0 0.0
        %328 = vmatpush1.msra.mxu0 %v306
        %329 = vmatprep.subr.mxu0 0.0
        %330 = vmatpush1.msra.mxu0 0.0
        %331 = vmatprep.subr.mxu0 0.0
        %332 = vmatpush1.msra.mxu0 0.0
        %333 = vmatprep.subr.mxu0 0.0
        %334 = vmatpush1.msra.mxu0 0.0
        %335 = vmatprep.subr.mxu0 0.0
        %336 = vmatpush1.msra.mxu0 0.0
        %337 = vmatprep.subr.mxu0 0.0
        %338 = vmatpush1.msra.mxu0 0.0
        %339 = vmatprep.subr.mxu0 0.0
        %340 = vmatpush1.msra.mxu0 0.0
        %341 = vmatprep.subr.mxu0 0.0
        %342 = vmatpush1.msra.mxu0 0.0
        %343 = vmatprep.subr.mxu0 0.0
        %344 = vmatpush1.msra.mxu0 0.0
        %345 = vmatprep.subr.mxu0 0.0
        %346 = vmatpush1.msra.mxu0 0.0
        %347 = vmatprep.subr.mxu0 0.0
        %348 = vmatpush1.msra.mxu0 0.0
        %349 = vmatprep.subr.mxu0 0.0
        %350 = vmatpush1.msra.mxu0 0.0
        %351 = vmatprep.subr.mxu0 0.0
        %352 = vmatpush1.msra.mxu0 0.0
        %353 = vmatprep.subr.mxu0 0.0
        %354 = vmatpush1.msra.mxu0 0.0
        %355 = vmatprep.subr.mxu0 0.0
        %356 = vmatpush1.msra.mxu0 0.0
        %357 = vmatprep.subr.mxu0 0.0
        %358 = vmatpush1.msra.mxu0 0.0
        %359 = vmatprep.subr.mxu0 0.0
        %360 = vmatpush1.msra.mxu0 0.0
        %361 = vmatprep.subr.mxu0 0.0
        %362 = vmatpush1.msra.mxu0 0.0
        %363 = vmatprep.subr.mxu0 0.0
        %364 = vmatpush1.msra.mxu0 0.0
        %365 = vmatprep.subr.mxu0 0.0
        %366 = vmatpush1.msra.mxu0 0.0
        %367 = vmatprep.subr.mxu0 0.0
        %368 = vmatpush1.msra.mxu0 0.0
        %369 = vmatprep.subr.mxu0 0.0
        %370 = vmatpush1.msra.mxu0 0.0
        %371 = vmatprep.subr.mxu0 0.0
        %372 = vmatpush1.msra.mxu0 0.0
        %373 = vmatprep.subr.mxu0 0.0
        %374 = vmatpush1.msra.mxu0 0.0
        %375 = vmatprep.subr.mxu0 0.0
        %376 = vmatpush1.msra.mxu0 0.0
        %377 = vmatprep.mubr.f32.mxu0 0.0
        %378 = vmatmul.mubr.f32.gmra.mrb[0].mxu0 %v308
        %v379 = vpop.f32.mrb[0].mxu0
        %v380 = vadd.f32 0.0, %v379
        %v381 = vpop.f32.mrb[0].mxu0
        %382 = vmatprep.mubr.f32.mxu0 0.0
        %383 = vmatmul.mubr.f32.gmra.mrb[0].mxu0 %v311
        %v384 = vpop.f32.mrb[0].mxu0
        %v385 = vadd.f32 0.0, %v384
        %v386 = vpop.f32.mrb[0].mxu0
        %387 = vdwg.mxu0
        %v389 = vsel %vm283, %v286, 0
        %v392 = vsel %vm283, %v287, 0
        %394 = vmatprep.subr.mxu0 0.0
        %395 = vmatpush1.msra.mxu0 %v288
        %396 = vmatprep.subr.mxu0 0.0
        %397 = vmatpush1.msra.mxu0 %v289
        %398 = vmatprep.subr.mxu0 0.0
        %399 = vmatpush1.msra.mxu0 %v290
        %400 = vmatprep.subr.mxu0 0.0
        %401 = vmatpush1.msra.mxu0 %v291
        %402 = vmatprep.subr.mxu0 0.0
        %403 = vmatpush1.msra.mxu0 %v292
        %404 = vmatprep.subr.mxu0 0.0
        %405 = vmatpush1.msra.mxu0 %v293
        %406 = vmatprep.subr.mxu0 0.0
        %407 = vmatpush1.msra.mxu0 %v294
        %408 = vmatprep.subr.mxu0 0.0
        %409 = vmatpush1.msra.mxu0 %v295
        %410 = vmatprep.subr.mxu0 0.0
        %411 = vmatpush1.msra.mxu0 0.0
        %412 = vmatprep.subr.mxu0 0.0
        %413 = vmatpush1.msra.mxu0 0.0
        %414 = vmatprep.subr.mxu0 0.0
        %415 = vmatpush1.msra.mxu0 0.0
        %416 = vmatprep.subr.mxu0 0.0
        %417 = vmatpush1.msra.mxu0 0.0
        %418 = vmatprep.subr.mxu0 0.0
        %419 = vmatpush1.msra.mxu0 0.0
        %420 = vmatprep.subr.mxu0 0.0
        %421 = vmatpush1.msra.mxu0 0.0
        %422 = vmatprep.subr.mxu0 0.0
        %423 = vmatpush1.msra.mxu0 0.0
        %424 = vmatprep.subr.mxu0 0.0
        %425 = vmatpush1.msra.mxu0 0.0
        %426 = vmatprep.subr.mxu0 0.0
        %427 = vmatpush1.msra.mxu0 0.0
        %428 = vmatprep.subr.mxu0 0.0
        %429 = vmatpush1.msra.mxu0 0.0
        %430 = vmatprep.subr.mxu0 0.0
        %431 = vmatpush1.msra.mxu0 0.0
        %432 = vmatprep.subr.mxu0 0.0
        %433 = vmatpush1.msra.mxu0 0.0
        %434 = vmatprep.subr.mxu0 0.0
        %435 = vmatpush1.msra.mxu0 0.0
        %436 = vmatprep.subr.mxu0 0.0
        %437 = vmatpush1.msra.mxu0 0.0
        %438 = vmatprep.subr.mxu0 0.0
        %439 = vmatpush1.msra.mxu0 0.0
        %440 = vmatprep.subr.mxu0 0.0
        %441 = vmatpush1.msra.mxu0 0.0
        %442 = vmatprep.subr.mxu0 0.0
        %443 = vmatpush1.msra.mxu0 0.0
        %444 = vmatprep.subr.mxu0 0.0
        %445 = vmatpush1.msra.mxu0 0.0
        %446 = vmatprep.subr.mxu0 0.0
        %447 = vmatpush1.msra.mxu0 0.0
        %448 = vmatprep.subr.mxu0 0.0
        %449 = vmatpush1.msra.mxu0 0.0
        %450 = vmatprep.subr.mxu0 0.0
        %451 = vmatpush1.msra.mxu0 0.0
        %452 = vmatprep.subr.mxu0 0.0
        %453 = vmatpush1.msra.mxu0 0.0
        %454 = vmatprep.subr.mxu0 0.0
        %455 = vmatpush1.msra.mxu0 0.0
        %456 = vmatprep.subr.mxu0 0.0
        %457 = vmatpush1.msra.mxu0 0.0
        %458 = vmatprep.mubr.f32.mxu0 0.0
        %459 = vmatmul.mubr.f32.gmra.mrb[0].mxu0 %v389
        %v460 = vpop.f32.mrb[0].mxu0
        %v461 = vadd.f32 %v380, %v460
        %v462 = vpop.f32.mrb[0].mxu0
        %463 = vmatprep.mubr.f32.mxu0 0.0
        %464 = vmatmul.mubr.f32.gmra.mrb[0].mxu0 %v392
        %v465 = vpop.f32.mrb[0].mxu0
        %v466 = vadd.f32 %v385, %v465
        %v467 = vpop.f32.mrb[0].mxu0
        %468 = vdwg.mxu0
        %v469 = vld [vmem:[#allocation2 + $0x4] sm:$0xff]
        %v470 = vld [vmem:[#allocation2 + $0xc] sm:$0xff]
        %s471 = scalar_lea.vmem [#allocation6], 128
        %v472 = vld [vmem:[%s471] sm:$0xff]
        %v473 = vld [vmem:[%s471 + $0x8] sm:$0xff]
        %v474 = vld [vmem:[%s471 + $0x10] sm:$0xff]
        %v475 = vld [vmem:[%s471 + $0x18] sm:$0xff]
        %v476 = vld [vmem:[%s471 + $0x20] sm:$0xff]
        %v477 = vld [vmem:[%s471 + $0x28] sm:$0xff]
        %v478 = vld [vmem:[%s471 + $0x30] sm:$0xff]
        %v479 = vld [vmem:[%s471 + $0x38] sm:$0xff]
        %v481 = vsel %vm283, %v469, 0
        %v484 = vsel %vm283, %v470, 0
        %486 = vmatprep.subr.mxu0 0.0
        %487 = vmatpush1.msra.mxu0 %v472
        %488 = vmatprep.subr.mxu0 0.0
        %489 = vmatpush1.msra.mxu0 %v473
        %490 = vmatprep.subr.mxu0 0.0
        %491 = vmatpush1.msra.mxu0 %v474
        %492 = vmatprep.subr.mxu0 0.0
        %493 = vmatpush1.msra.mxu0 %v475
        %494 = vmatprep.subr.mxu0 0.0
        %495 = vmatpush1.msra.mxu0 %v476
        %496 = vmatprep.subr.mxu0 0.0
        %497 = vmatpush1.msra.mxu0 %v477
        %498 = vmatprep.subr.mxu0 0.0
        %499 = vmatpush1.msra.mxu0 %v478
        %500 = vmatprep.subr.mxu0 0.0
        %501 = vmatpush1.msra.mxu0 %v479
        %502 = vmatprep.subr.mxu0 0.0
        %503 = vmatpush1.msra.mxu0 0.0
        %504 = vmatprep.subr.mxu0 0.0
        %505 = vmatpush1.msra.mxu0 0.0
        %506 = vmatprep.subr.mxu0 0.0
        %507 = vmatpush1.msra.mxu0 0.0
        %508 = vmatprep.subr.mxu0 0.0
        %509 = vmatpush1.msra.mxu0 0.0
        %510 = vmatprep.subr.mxu0 0.0
        %511 = vmatpush1.msra.mxu0 0.0
        %512 = vmatprep.subr.mxu0 0.0
        %513 = vmatpush1.msra.mxu0 0.0
        %514 = vmatprep.subr.mxu0 0.0
        %515 = vmatpush1.msra.mxu0 0.0
        %516 = vmatprep.subr.mxu0 0.0
        %517 = vmatpush1.msra.mxu0 0.0
        %518 = vmatprep.subr.mxu0 0.0
        %519 = vmatpush1.msra.mxu0 0.0
        %520 = vmatprep.subr.mxu0 0.0
        %521 = vmatpush1.msra.mxu0 0.0
        %522 = vmatprep.subr.mxu0 0.0
        %523 = vmatpush1.msra.mxu0 0.0
        %524 = vmatprep.subr.mxu0 0.0
        %525 = vmatpush1.msra.mxu0 0.0
        %526 = vmatprep.subr.mxu0 0.0
        %527 = vmatpush1.msra.mxu0 0.0
        %528 = vmatprep.subr.mxu0 0.0
        %529 = vmatpush1.msra.mxu0 0.0
        %530 = vmatprep.subr.mxu0 0.0
        %531 = vmatpush1.msra.mxu0 0.0
        %532 = vmatprep.subr.mxu0 0.0
        %533 = vmatpush1.msra.mxu0 0.0
        %534 = vmatprep.subr.mxu0 0.0
        %535 = vmatpush1.msra.mxu0 0.0
        %536 = vmatprep.subr.mxu0 0.0
        %537 = vmatpush1.msra.mxu0 0.0
        %538 = vmatprep.subr.mxu0 0.0
        %539 = vmatpush1.msra.mxu0 0.0
        %540 = vmatprep.subr.mxu0 0.0
        %541 = vmatpush1.msra.mxu0 0.0
        %542 = vmatprep.subr.mxu0 0.0
        %543 = vmatpush1.msra.mxu0 0.0
        %544 = vmatprep.subr.mxu0 0.0
        %545 = vmatpush1.msra.mxu0 0.0
        %546 = vmatprep.subr.mxu0 0.0
        %547 = vmatpush1.msra.mxu0 0.0
        %548 = vmatprep.subr.mxu0 0.0
        %549 = vmatpush1.msra.mxu0 0.0
        %550 = vmatprep.mubr.f32.mxu0 0.0
        %551 = vmatmul.mubr.f32.gmra.mrb[0].mxu0 %v481
        %v552 = vpop.f32.mrb[0].mxu0
        %v553 = vadd.f32 0.0, %v552
        %v554 = vpop.f32.mrb[0].mxu0
        %555 = vmatprep.mubr.f32.mxu0 0.0
        %556 = vmatmul.mubr.f32.gmra.mrb[0].mxu0 %v484
        %v557 = vpop.f32.mrb[0].mxu0
        %v558 = vadd.f32 0.0, %v557
        %v559 = vpop.f32.mrb[0].mxu0
        %560 = vdwg.mxu0
        %v561 = vadd.f32 %v461, %v553
        %v562 = vadd.f32 %v466, %v558
        %v563 = vld [vmem:[%s4] sm:$0x1]
        %v565 = vlaneseq
        %v566 = vshrl.u32 %v565, 7
        %v567 = vsub.s32 0, %v566
        %v568 = vrot.slane %v563, %v567
        %v570 = vadd.f32 %v561, %v568
        %v571 = vadd.f32 %v562, %v568
        %572 = vst [vmem:[%s257] sm:$0xff] %v570
        %573 = vst [vmem:[%s257 + $0x8] sm:$0xff] %v571
        %s574 = sand.u32 %s141, 1
        %s575 = scalar_lea.sflag [#allocation5], %s574
        %s576 = sand.u32 %s141, 1
        %s577 = smul.addr %s576, 16
        %s578 = scalar_lea.vmem [#allocation8], %s577
        // Predicated region
        $region49: #{tpu_custom_call.1} parent=39 // pred_check
          %p579 = pneg %p151
        $region50: #{tpu_custom_call.1} parent=39 // pred_check_branch
          %581 = sbr.rel (%p579) target = $region52
        $region51: #{tpu_custom_call.1} parent=39 // pred_region
          %s583 = ssub.s32 256, 256
          %584 = vsyncadd %s575, %s583
          %s585 = smul.addr %s23, 2
          %s586 = smul.addr %s585, 128
          %s587 = scalar_lea.hbm %s5, %s586
          %s588 = sshll.u32 %s578, 4
          %s589 = int_to_ptr.vmem [resolvable:$true] %s588
          %594 = dma.vmem_to_hbm [thread:$0]  %s589, 256, %s587, %s575, 128, 128, 8
        $region52: #{tpu_custom_call.1} parent=39 // pred_fallthru
          _
      $region40: #{tpu_custom_call.1} parent=5 // pred_fallthru
        _
      %p595 = scmp.le.s32.totalorder 2, %s18
      // Predicated region
      $region53: #{tpu_custom_call.1} parent=5 // pred_check
        %p596 = pneg %p595
      $region54: #{tpu_custom_call.1} parent=5 // pred_check_branch
        %598 = sbr.rel (%p596) target = $region56
      $region55: #{tpu_custom_call.1} parent=5 // pred_region
        %s599 = ssub.s32 %s18, 2
        // Predicated region
        $region57: #{tpu_custom_call.1} parent=55 // pred_check
          %p600 = pneg %p157
        $region58: #{tpu_custom_call.1} parent=55 // pred_check_branch
          %602 = sbr.rel (%p600) target = $region60
        $region59: #{tpu_custom_call.1} parent=55 // pred_region
          %s603 = sand.u32 %s142, 1
          %s604 = scalar_lea.sflag [#allocation5], %s603
          %s605 = sand.u32 %s142, 1
          %s606 = smul.addr %s605, 16
          %s607 = scalar_lea.vmem [#allocation8], %s606
          %608 = dma.done %s604, 256
        $region60: #{tpu_custom_call.1} parent=55 // pred_fallthru
          _
      $region56: #{tpu_custom_call.1} parent=5 // pred_fallthru
        _
    $region6: #{tpu_custom_call.1} parent=1 // loop_footer
      %s22 = sadd.s32 1, %s18
    $region7: #{tpu_custom_call.1} parent=1 // loop_footer_branch
      %17 = sbr.rel target = $region3
    $region8: #{tpu_custom_call.1} parent=1 // loop_exit
      _
    %609 = vsyncpa [#allocation4], 1
    %s610 = scalar_lea.sflag [#allocation4], 1
    %611 = vsyncpa %s610, 1
    %612 = vsyncpa [#allocation7], 1
    %613 = vsyncpa [#allocation5], 1
    %s614 = scalar_lea.sflag [#allocation5], 1
    %615 = vsyncpa %s614, 1

</llo_original>
